<compile_context>
chip_gen: v7x
topology: tpu7x:2x2x1
jax: 0.10.0
libtpu: 0.0.40
codegen_flags: <defaults>
</compile_context>

<pallas_src>
import jax
import jax.numpy as jnp
import numpy as np
from jax.experimental import pallas as pl
from jax.experimental.pallas import tpu as pltpu


def _round_up(a, b):
    return (a + b - 1) // b * b


# ----------------------------- Pallas kernel ------------------------------ #
def _tensor_square_kernel(x_ref, k2_ref, o_ref):
    """x_ref: [TZ, Nin], k2_ref: [Nin*Nin, Nout_pad], o_ref: [TZ, Nout_pad]."""
    n_in = x_ref.shape[1]
    x = x_ref[...].astype(jnp.float32)                       # [TZ, Nin]

    # q[z, i*Nin + j] = x[z, i] * x[z, j]
    # Built as Nin lane-broadcast multiplies + a lane concat; stays 2-D (no
    # [TZ, Nin, Nin] 3-D intermediate and its sublane->lane reshape relayout).
    q = jnp.concatenate([x * x[:, i:i + 1] for i in range(n_in)], axis=1)

    # Single deep MXU matmul (depth Nin^2, width Nout_pad) written directly to the
    # output tile: bf16 operands, f32 accumulation.
    o_ref[...] = jnp.dot(q.astype(k2_ref.dtype), k2_ref[...],
                         preferred_element_type=jnp.float32).astype(o_ref.dtype)


# ----------------------------- tile selection ------------------------------ #
def _choose_tz(Z, n_in, n_out_pad, x_bytes, k2_bytes, out_bytes, tz):
    # Only sublane alignment applies: the x block's last dim equals the full n_in.
    align = 16 if min(x_bytes, out_bytes) < 4 else 8
    tz = max(align, min(tz, _round_up(Z, align)))
    # Give the v7x megacore (and the DMA pipeliner) at least 2 grid steps.
    if Z > align:
        tz = min(tz, _round_up(pl.cdiv(Z, 2), align))
    # VMEM budget: double-buffered x/out blocks + double-buffered K2 + in-kernel
    # q and f32 matmul result.  12 MiB fits the default scoped VMEM on v5e (16 MiB)
    # and leaves ample headroom on v6e/v7x.
    budget = 12 * 1024 * 1024
    k2_total = 2 * n_in * n_in * n_out_pad * k2_bytes
    per_row = (2 * n_in * x_bytes + 2 * n_out_pad * out_bytes
               + 4 * n_in * n_in + 4 * n_out_pad)
    tz_cap = max(align, (budget - k2_total) // per_row // align * align)
    return max(align, min(tz, tz_cap))


# ------------------------------ pallas wrapper ----------------------------- #
def tensor_square_apply(x_flat, k2, n_out, *, tz=512, out_dtype=jnp.float32):
    """x_flat: [Z, Nin], k2: [Nin*Nin, Nout_pad] -> [Z, n_out] in out_dtype."""
    Z, n_in = x_flat.shape
    n_out_pad = k2.shape[1]
    assert k2.shape[0] == n_in * n_in
    assert n_out_pad % 128 == 0 and n_out_pad >= n_out

    x_bytes = x_flat.dtype.itemsize
    k2_bytes = k2.dtype.itemsize
    out_bytes = jnp.dtype(out_dtype).itemsize
    tz = _choose_tz(Z, n_in, n_out_pad, x_bytes, k2_bytes, out_bytes, tz)

    Zp = _round_up(Z, tz)
    if Zp != Z:
        x_flat = jnp.pad(x_flat, ((0, Zp - Z), (0, 0)))       # zero rows are free

    grid = (Zp // tz,)
    cost = pl.CostEstimate(
        flops=2 * Zp * n_in * n_in * n_out_pad + Zp * n_in * n_in,
        transcendentals=0,
        bytes_accessed=(x_bytes * Zp * n_in
                        + k2_bytes * n_in * n_in * n_out_pad
                        + out_bytes * Zp * n_out_pad),
    )

    out = pl.pallas_call(
        _tensor_square_kernel,
        out_shape=jax.ShapeDtypeStruct((Zp, n_out_pad), out_dtype),
        grid_spec=pltpu.PrefetchScalarGridSpec(
            num_scalar_prefetch=0,
            grid=grid,
            in_specs=[
                # batch tile of features
                pl.BlockSpec((tz, n_in), lambda i: (i, 0)),
                # pre-arranged kernel K2, constant index map -> fetched once.
                # TODO(synk): pipeline_mode=pl.Buffered(1) would halve this
                # operand's double-buffer VMEM for very large dim_in.
                pl.BlockSpec((n_in * n_in, n_out_pad), lambda i: (0, 0)),
            ],
            out_specs=pl.BlockSpec((tz, n_out_pad), lambda i: (i, 0)),
        ),
        compiler_params=pltpu.CompilerParams(
            dimension_semantics=("parallel",),
            vmem_limit_bytes=32 * 1024 * 1024),
        cost_estimate=cost,
    )(x_flat, k2)

    # NOTE: if dim_out << 128 and the kernel ever becomes writeback-bound, an
    # unpadded [tz, dim_out] out block (masked vst, ~10x fewer HBM bytes) is the
    # alternative to benchmark.
    return out[:Z, :n_out]


# ------------------------- module-level wrapper --------------------------- #
class LearnableTensorSquarePallas:
    def __init__(self, dim_in, dim_ts, dim_out, key, *, mxu_dtype=jnp.bfloat16):
        self.dim_in = dim_in
        self.dim_ts = dim_ts
        self.dim_out = dim_out
        self.mxu_dtype = mxu_dtype
        self.n_out_pad = _round_up(dim_out, 128)

        k_tval, k_tmask, k_w = jax.random.split(key, 3)
        # Synthetic sparse-ish structural buffer T: [dim_ts, dim_in * dim_in]
        t_dense = jax.random.normal(k_tval, (dim_ts, dim_in * dim_in), jnp.float32)
        mask = jax.random.uniform(k_tmask, (dim_ts, dim_in * dim_in)) < 0.25
        self.T = jnp.where(mask, t_dense, 0.0)
        # KernelLinear weight W: [dim_out, dim_ts]
        self.W = jax.random.normal(k_w, (dim_out, dim_ts), jnp.float32) / np.sqrt(dim_ts)

        # K2[i*dim_in + j, k] = K[k, i, j], zero-padded over k to n_out_pad.
        # Precomputed ONCE at init (hoisted out of __call__ per review).
        K = jnp.matmul(self.W, self.T, precision=jax.lax.Precision.HIGHEST)
        K = K.reshape(dim_out, dim_in, dim_in)
        K2 = jnp.transpose(K, (1, 2, 0)).reshape(dim_in * dim_in, dim_out)
        K2 = jnp.pad(K2, ((0, 0), (0, self.n_out_pad - dim_out)))
        self.k2 = K2.astype(mxu_dtype)

    def __call__(self, features, *, tz=512):
        *size, n = features.shape
        assert n == self.dim_in
        x_flat = features.reshape(-1, n)
        # Feed bf16 straight through (halves input DMA); anything else -> f32.
        if x_flat.dtype not in (jnp.float32, jnp.bfloat16):
            x_flat = x_flat.astype(jnp.float32)
        out_dtype = x_flat.dtype
        out = tensor_square_apply(x_flat, self.k2, self.dim_out,
                                  tz=tz, out_dtype=out_dtype)
        return out.reshape(*size, self.dim_out)


# --------------------------------- main ----------------------------------- #
if __name__ == "__main__":
    key = jax.random.PRNGKey(0)
    k_param, k_x = jax.random.split(key)

    dim_in, dim_ts, dim_out = 8, 20, 12
    module = LearnableTensorSquarePallas(dim_in, dim_ts, dim_out, k_param)

    # features: [batch, seq, channels] = [2, 8, 8]  (flattened Z = 16)
    features = jax.random.normal(k_x, (2, 8, dim_in), jnp.float32)

    out = module(features)
    out = jax.block_until_ready(out)
    assert out.shape == (2, 8, dim_out)
    out_np = np.asarray(out, dtype=np.float32)

    x_flat = features.reshape(-1, dim_in)

    # (1) Exactness check: reproduce the kernel's bf16-operand / f32-accumulate math.
    q = (x_flat[:, :, None] * x_flat[:, None, :]).reshape(x_flat.shape[0], -1)
    q_bf = q.astype(module.mxu_dtype).astype(jnp.float32)
    ref_exact = jnp.dot(q_bf, module.k2.astype(jnp.float32),
                        precision=jax.lax.Precision.HIGHEST)[:, :dim_out]
    ref_exact = np.asarray(ref_exact.reshape(2, 8, dim_out), dtype=np.float32)
    np.testing.assert_allclose(out_np, ref_exact, rtol=1e-3, atol=1e-3)

    # (2) Fidelity check vs. the pure-f32 reference of the PyTorch forward
    #     (loose tolerance accounts for bf16 MXU operands).
    K = jnp.matmul(module.W, module.T,
                   precision=jax.lax.Precision.HIGHEST).reshape(dim_out, dim_in, dim_in)
    ref_f32 = jnp.einsum('kij,zi,zj->zk', K, x_flat, x_flat,
                         precision=jax.lax.Precision.HIGHEST)
    ref_f32 = np.asarray(ref_f32.reshape(2, 8, dim_out), dtype=np.float32)
    np.testing.assert_allclose(out_np, ref_f32, rtol=5e-2, atol=1e-1)

    print("KERNEL_OK")
</pallas_src>

<mosaic_0001>
module attributes {stable_mosaic.version = 11 : i64} {
  func.func @_tensor_square_kernel(%arg0: i32, %arg1: memref<8x8xf32, #tpu.memory_space<vmem>>, %arg2: memref<64x128xbf16, #tpu.memory_space<vmem>>, %arg3: memref<8x128xf32, #tpu.memory_space<vmem>>) attributes {dimension_semantics = [#tpu.dimension_semantics<parallel>], iteration_bounds = array<i64: 2>, scalar_prefetch = 0 : i64, scratch_operands = 0 : i64, tpu.core_type = #tpu.core_type<tc>, window_params = [{transform_indices = @transform_0, window_bounds = array<i64: 8, 8>}, {pipeline_mode = #tpu.pipeline_mode<synchronous>, transform_indices = @transform_1, window_bounds = array<i64: 64, 128>}, {transform_indices = @transform_2, window_bounds = array<i64: 8, 128>}]} {
    %c0 = arith.constant 0 : index
    %c0_0 = arith.constant 0 : index
    %0 = vector.load %arg1[%c0, %c0_0] : memref<8x8xf32, #tpu.memory_space<vmem>>, vector<8x8xf32>
    %1 = vector.extract_strided_slice %0 {offsets = [0, 0], sizes = [8, 1], strides = [1, 1]} : vector<8x8xf32> to vector<8x1xf32>
    %2 = vector.broadcast %1 : vector<8x1xf32> to vector<8x8xf32>
    %3 = arith.mulf %0, %2 : vector<8x8xf32>
    %4 = vector.extract_strided_slice %0 {offsets = [0, 1], sizes = [8, 1], strides = [1, 1]} : vector<8x8xf32> to vector<8x1xf32>
    %5 = vector.broadcast %4 : vector<8x1xf32> to vector<8x8xf32>
    %6 = arith.mulf %0, %5 : vector<8x8xf32>
    %7 = vector.extract_strided_slice %0 {offsets = [0, 2], sizes = [8, 1], strides = [1, 1]} : vector<8x8xf32> to vector<8x1xf32>
    %8 = vector.broadcast %7 : vector<8x1xf32> to vector<8x8xf32>
    %9 = arith.mulf %0, %8 : vector<8x8xf32>
    %10 = vector.extract_strided_slice %0 {offsets = [0, 3], sizes = [8, 1], strides = [1, 1]} : vector<8x8xf32> to vector<8x1xf32>
    %11 = vector.broadcast %10 : vector<8x1xf32> to vector<8x8xf32>
    %12 = arith.mulf %0, %11 : vector<8x8xf32>
    %13 = vector.extract_strided_slice %0 {offsets = [0, 4], sizes = [8, 1], strides = [1, 1]} : vector<8x8xf32> to vector<8x1xf32>
    %14 = vector.broadcast %13 : vector<8x1xf32> to vector<8x8xf32>
    %15 = arith.mulf %0, %14 : vector<8x8xf32>
    %16 = vector.extract_strided_slice %0 {offsets = [0, 5], sizes = [8, 1], strides = [1, 1]} : vector<8x8xf32> to vector<8x1xf32>
    %17 = vector.broadcast %16 : vector<8x1xf32> to vector<8x8xf32>
    %18 = arith.mulf %0, %17 : vector<8x8xf32>
    %19 = vector.extract_strided_slice %0 {offsets = [0, 6], sizes = [8, 1], strides = [1, 1]} : vector<8x8xf32> to vector<8x1xf32>
    %20 = vector.broadcast %19 : vector<8x1xf32> to vector<8x8xf32>
    %21 = arith.mulf %0, %20 : vector<8x8xf32>
    %22 = vector.extract_strided_slice %0 {offsets = [0, 7], sizes = [8, 1], strides = [1, 1]} : vector<8x8xf32> to vector<8x1xf32>
    %23 = vector.broadcast %22 : vector<8x1xf32> to vector<8x8xf32>
    %24 = arith.mulf %0, %23 : vector<8x8xf32>
    %25 = tpu.concatenate %3, %6, %9, %12, %15, %18, %21, %24 in 1 : vector<8x8xf32>, vector<8x8xf32>, vector<8x8xf32>, vector<8x8xf32>, vector<8x8xf32>, vector<8x8xf32>, vector<8x8xf32>, vector<8x8xf32> -> vector<8x64xf32>
    %26 = arith.truncf %25 : vector<8x64xf32> to vector<8x64xbf16>
    %c0_1 = arith.constant 0 : index
    %c0_2 = arith.constant 0 : index
    %27 = vector.load %arg2[%c0_1, %c0_2] : memref<64x128xbf16, #tpu.memory_space<vmem>>, vector<64x128xbf16>
    %cst = arith.constant dense<0.000000e+00> : vector<8x128xf32>
    %28 = tpu.matmul %26, %27, %cst {dimension_numbers = #tpu.dot_dimension_numbers<[1], [0], [0], [1], [0, 0, 1, 1], [], []>} : vector<8x64xbf16>, vector<64x128xbf16>, vector<8x128xf32> -> vector<8x128xf32>
    %c0_3 = arith.constant 0 : index
    %c0_4 = arith.constant 0 : index
    %29 = vector.load %arg3[%c0_3, %c0_4] : memref<8x128xf32, #tpu.memory_space<vmem>>, vector<8x128xf32>
    tpu.vector_store %arg3[%c0_3, %c0_4], %28 {strides = array<i32>} : memref<8x128xf32, #tpu.memory_space<vmem>>, vector<8x128xf32>,
    return
  }
  func.func @transform_0(%arg0: i32) -> (i32, i32) {
    %c0_i32 = arith.constant 0 : i32
    %c0_i32_0 = arith.constant 0 : i32
    return %arg0, %c0_i32 : i32, i32
  }
  func.func @transform_1(%arg0: i32) -> (i32, i32) {
    %c0_i32 = arith.constant 0 : i32
    %c0_i32_0 = arith.constant 0 : i32
    %c0_i32_1 = arith.constant 0 : i32
    return %c0_i32, %c0_i32_0 : i32, i32
  }
  func.func @transform_2(%arg0: i32) -> (i32, i32) {
    %c0_i32 = arith.constant 0 : i32
    %c0_i32_0 = arith.constant 0 : i32
    return %arg0, %c0_i32 : i32, i32
  }
}

</mosaic_0001>

<llo_original>
// kernel: tpu_custom_call.1
$region0: #{tpu_custom_call.1}
  #allocation0 [shape = 'u32[]', space=smem, size = 0x4, offset = 0x4, fixed_abs, tag = 'smem constant byte address 0x4 - core index']
  #allocation1 [shape = 'u32[144,128]{1,0:T(1,128)}', space=vmem, size = 0x12000, scoped, tag = 'internal scratch']
  %s0 = inlined_call_operand.vmem [shape: f32[16,8], index: 0, kind: input, shape index: {}]
  %s1 = inlined_call_operand.hbm [shape: bf16[64,128], index: 1, kind: input, shape index: {}]
  %s2 = inlined_call_operand.hbm [shape: f32[16,128], index: 2, kind: output, shape index: {}]
  %s3 = sld [smem:[#allocation0]]
  $region45: #{tpu_custom_call.1} parent=0
    _
  %s5 = ssub.s32 1, %s3
  %s6 = scalar_select 0, %s5, %s3
  $region1: #{tpu_custom_call.1} parent=0
    #allocation2 [shape = 'u8[16384]{0}', space=vmem, size = 0x4000, scoped, tag = 'input window, operand 1, single buffered']
    #allocation3 [shape = 's32[2]{0}', space=sflag, size = 0x8, scoped, tag = 'scoped memory for tpu_custom_call.1']
    #allocation4 [shape = 's32[2]{0}', space=sflag, size = 0x8, scoped, tag = 'scoped memory for tpu_custom_call.1']
    #allocation5 [shape = 'u8[8192]{0}', space=vmem, size = 0x2000, scoped, tag = 'output window, operand 0']
    %7 = vsyncpa [#allocation3], 0
    %8 = vsyncpa [#allocation4], 0
    %s9 = scalar_lea.sflag [#allocation4], 1
    %10 = vsyncpa %s9, 0
    loop: start=0, step=1, limit=4
    $region2: #{tpu_custom_call.1} parent=1 // loop_pre_header
      _
    $region3: #{tpu_custom_call.1} parent=1 // loop_header
      %s12 = sphi 0, %s16
      %p13 = scmp.ge.s32.totalorder %s12, 4
      %s22 = sphi 0, %s24
      %s25 = sphi 0, %s22
      %s26 = sphi 0, %s25
      %s42 = sphi 0, %s26
      %s46 = sphi 0, %s46
      %s48 = sphi 0, %s46
      %s49 = sphi 0, %s48
      %s63 = sphi 0, %s49
      %s69 = sphi 0, %s71
      %s72 = sphi 0, %s69
      %s73 = sphi 0, %s72
      %s89 = sphi 0, %s73
    $region4: #{tpu_custom_call.1} parent=1 // loop_header_branch
      %15 = sbr.rel (%p13) target = $region8
    $region5: #{tpu_custom_call.1} parent=1 // loop_body
      %s17 = ssub.s32 %s12, 1
      %s18 = ssub.s32 %s12, 2
      %s19 = sadd.s32 %s12, 1
      %s20 = ssub.s32 %s12, %s19
      %p21 = scmp.eq.s32.totalorder %s20, 0
      %s23 = sadd.s32 %s22, 1
      %s24 = scalar_select %p21, %s22, %s23
      %p27 = pneg %p21
      %p28 = scmp.eq.s32.totalorder %s12, 1
      %p29 = por %p27, %p28
      %p30 = scmp.ne.s32.totalorder %s22, %s25
      %p31 = scmp.eq.s32.totalorder %s12, 0
      %p32 = por %p30, %p31
      %p33 = scmp.ne.s32.totalorder %s22, %s25
      %p34 = scmp.eq.s32.totalorder %s17, 1
      %p35 = por %p33, %p34
      %p36 = scmp.ne.s32.totalorder %s25, %s26
      %p37 = scmp.eq.s32.totalorder %s17, 0
      %p38 = por %p36, %p37
      %p39 = scmp.ne.s32.totalorder %s25, %s26
      %p40 = scmp.eq.s32.totalorder %s18, 1
      %p41 = por %p39, %p40
      %p43 = scmp.ne.s32.totalorder %s26, %s42
      %p44 = scmp.eq.s32.totalorder %s18, 0
      %p45 = por %p43, %p44
      %s47 = sadd.s32 %s46, 1
      %p50 = scmp.eq.s32.totalorder %s12, 1
      %p51 = scmp.ne.s32.totalorder %s46, %s48
      %p52 = scmp.eq.s32.totalorder %s12, 0
      %p53 = por %p51, %p52
      %p54 = scmp.ne.s32.totalorder %s46, %s48
      %p55 = scmp.eq.s32.totalorder %s17, 1
      %p56 = por %p54, %p55
      %p57 = scmp.ne.s32.totalorder %s48, %s49
      %p58 = scmp.eq.s32.totalorder %s17, 0
      %p59 = por %p57, %p58
      %p60 = scmp.ne.s32.totalorder %s48, %s49
      %p61 = scmp.eq.s32.totalorder %s18, 1
      %p62 = por %p60, %p61
      %p64 = scmp.ne.s32.totalorder %s49, %s63
      %p65 = scmp.eq.s32.totalorder %s18, 0
      %p66 = por %p64, %p65
      %s67 = ssub.s32 %s12, %s19
      %p68 = scmp.eq.s32.totalorder %s67, 0
      %s70 = sadd.s32 %s69, 1
      %s71 = scalar_select %p68, %s69, %s70
      %p74 = pneg %p68
      %p75 = scmp.eq.s32.totalorder %s12, 1
      %p76 = por %p74, %p75
      %p77 = scmp.ne.s32.totalorder %s69, %s72
      %p78 = scmp.eq.s32.totalorder %s12, 0
      %p79 = por %p77, %p78
      %p80 = scmp.ne.s32.totalorder %s69, %s72
      %p81 = scmp.eq.s32.totalorder %s17, 1
      %p82 = por %p80, %p81
      %p83 = scmp.ne.s32.totalorder %s72, %s73
      %p84 = scmp.eq.s32.totalorder %s17, 0
      %p85 = por %p83, %p84
      %p86 = scmp.ne.s32.totalorder %s72, %s73
      %p87 = scmp.eq.s32.totalorder %s18, 1
      %p88 = por %p86, %p87
      %p90 = scmp.ne.s32.totalorder %s73, %s89
      %p91 = scmp.eq.s32.totalorder %s18, 0
      %p92 = por %p90, %p91
      %p93 = scmp.le.s32.totalorder 1, %s12
      %p94 = scmp.lt.s32.totalorder %s12, 3
      %p95 = pnand %p93, %p94
      %p96 = pneg %p95
      // Predicated region
      $region9: #{tpu_custom_call.1} parent=5 // pred_check
        _
      $region10: #{tpu_custom_call.1} parent=5 // pred_check_branch
        %98 = sbr.rel (%p95) target = $region12
      $region11: #{tpu_custom_call.1} parent=5 // pred_region
        %s99 = ssub.s32 %s12, 1
        // Predicated region
        $region13: #{tpu_custom_call.1} parent=11 // pred_check
          %p100 = pneg %p59
        $region14: #{tpu_custom_call.1} parent=11 // pred_check_branch
          %102 = sbr.rel (%p100) target = $region16
        $region15: #{tpu_custom_call.1} parent=11 // pred_region
          %s104 = ssub.s32 512, 512
          %105 = vsyncadd [#allocation3], %s104
          %s106 = sshll.u32 [#allocation2], 4
          %s107 = int_to_ptr.vmem [resolvable:$true] %s106
          %112 = dma.hbm_to_vmem [thread:$0]  %s1, 512, %s107, [#allocation3], 64, 64, 4
        $region16: #{tpu_custom_call.1} parent=11 // pred_fallthru
          _
      $region12: #{tpu_custom_call.1} parent=5 // pred_fallthru
        _
      %p113 = scmp.lt.s32.totalorder %s12, 2
      // Predicated region
      $region17: #{tpu_custom_call.1} parent=5 // pred_check
        %p114 = pneg %p113
      $region18: #{tpu_custom_call.1} parent=5 // pred_check_branch
        %116 = sbr.rel (%p114) target = $region20
      $region19: #{tpu_custom_call.1} parent=5 // pred_region
        // Predicated region
        $region21: #{tpu_custom_call.1} parent=19 // pred_check
          %p117 = pneg %p32
        $region22: #{tpu_custom_call.1} parent=19 // pred_check_branch
          %119 = sbr.rel (%p117) target = $region24
        $region23: #{tpu_custom_call.1} parent=19 // pred_region
          %p120 = scmp.lt.s32.totalorder %s12, 1
          %s121 = scalar_select %p120, %s12, 1
          %s122 = smul.addr %s121, 8
          %s123 = scalar_lea.vmem %s0, %s122
        $region24: #{tpu_custom_call.1} parent=19 // pred_fallthru
          _
      $region20: #{tpu_custom_call.1} parent=5 // pred_fallthru
        _
      %p124 = scmp.le.s32.totalorder 1, %s12
      %p125 = scmp.lt.s32.totalorder %s12, 3
      %p126 = pnand %p124, %p125
      %p127 = pneg %p126
      // Predicated region
      $region25: #{tpu_custom_call.1} parent=5 // pred_check
        _
      $region26: #{tpu_custom_call.1} parent=5 // pred_check_branch
        %129 = sbr.rel (%p126) target = $region28
      $region27: #{tpu_custom_call.1} parent=5 // pred_region
        %s130 = ssub.s32 %s12, 1
        // Predicated region
        $region29: #{tpu_custom_call.1} parent=27 // pred_check
          %p131 = pneg %p59
        $region30: #{tpu_custom_call.1} parent=27 // pred_check_branch
          %133 = sbr.rel (%p131) target = $region32
        $region31: #{tpu_custom_call.1} parent=27 // pred_region
          %134 = dma.done [#allocation3], 512
        $region32: #{tpu_custom_call.1} parent=27 // pred_fallthru
          _
        %p135 = scmp.lt.s32.totalorder %s17, 1
        %s136 = scalar_select %p135, %s17, 1
        %s137 = smul.addr %s136, 8
        %s138 = scalar_lea.vmem %s0, %s137
        %p139 = pneg %p38
        %p140 = pneg %p35
        %p141 = pneg %p59
        %p142 = pneg %p56
        %p143 = pneg %p85
        %p144 = pneg %p82
        %s145 = sand.u32 %s72, 1
        %s146 = scalar_lea.sflag [#allocation4], %s145
        %s147 = sand.u32 %s72, 1
        %s148 = smul.addr %s147, 8
        %s149 = scalar_lea.vmem [#allocation5], %s148
        %p150 = scmp.lt.s32.totalorder %s17, 1
        %s151 = scalar_select %p150, %s17, 1
        %s152 = smul.addr %s151, 8
        %s153 = scalar_lea.vmem %s0, %s152
        %v155 = vld [vmem:[%s153] sm:$0xff]
        %157 = vset.pattern.permute.xlu0 0
        %158 = vperm.xlu0 %157, %v155
        %v159 = vpop.permute.xlu0 %158
        %v161 = vmul.f32 %v155, %v159
        %162 = vset.pattern.permute.xlu0 1
        %163 = vperm.xlu0 %162, %v155
        %v164 = vpop.permute.xlu0 %163
        %v166 = vmul.f32 %v155, %v164
        %167 = vset.pattern.permute.xlu0 2
        %168 = vperm.xlu0 %167, %v155
        %v169 = vpop.permute.xlu0 %168
        %v171 = vmul.f32 %v155, %v169
        %172 = vset.pattern.permute.xlu0 3
        %173 = vperm.xlu0 %172, %v155
        %v174 = vpop.permute.xlu0 %173
        %v176 = vmul.f32 %v155, %v174
        %177 = vset.pattern.permute.xlu0 4
        %178 = vperm.xlu0 %177, %v155
        %v179 = vpop.permute.xlu0 %178
        %v181 = vmul.f32 %v155, %v179
        %182 = vset.pattern.permute.xlu0 5
        %183 = vperm.xlu0 %182, %v155
        %v184 = vpop.permute.xlu0 %183
        %v186 = vmul.f32 %v155, %v184
        %187 = vset.pattern.permute.xlu0 6
        %188 = vperm.xlu0 %187, %v155
        %v189 = vpop.permute.xlu0 %188
        %v191 = vmul.f32 %v155, %v189
        %192 = vset.pattern.permute.xlu0 7
        %193 = vperm.xlu0 %192, %v155
        %v194 = vpop.permute.xlu0 %193
        %v196 = vmul.f32 %v155, %v194
        %198 = vrot.lane.b32.xlu0 %v166, 8
        %v199 = vpop.permute.xlu0 %198
        %202 = vrot.lane.b32.xlu0 %v171, 16
        %v203 = vpop.permute.xlu0 %202
        %206 = vrot.lane.b32.xlu0 %v176, 24
        %v207 = vpop.permute.xlu0 %206
        %210 = vrot.lane.b32.xlu0 %v181, 32
        %v211 = vpop.permute.xlu0 %210
        %214 = vrot.lane.b32.xlu0 %v186, 40
        %v215 = vpop.permute.xlu0 %214
        %218 = vrot.lane.b32.xlu0 %v191, 48
        %v219 = vpop.permute.xlu0 %218
        %222 = vrot.lane.b32.xlu0 %v196, 56
        %v223 = vpop.permute.xlu0 %222
        %vm225 = vcmask 64512
        %v226 = vsel %vm225, %v161, %v199
        %vm227 = vcmask 130048
        %v228 = vsel %vm227, %v226, %v203
        %vm229 = vcmask 195584
        %v230 = vsel %vm229, %v228, %v207
        %vm231 = vcmask 261120
        %v232 = vsel %vm231, %v230, %v211
        %vm233 = vcmask 326656
        %v234 = vsel %vm233, %v232, %v215
        %vm235 = vcmask 392192
        %v236 = vsel %vm235, %v234, %v219
        %vm237 = vcmask 457728
        %v238 = vsel %vm237, %v236, %v223
        %v239 = vpack.c.bf16 %v238, %v238
        %v240 = vld [vmem:[#allocation2] sm:$0xf]
        %v241 = vld [vmem:[#allocation2 + $0x4] sm:$0xf]
        %v242 = vld [vmem:[#allocation2 + $0x8] sm:$0xf]
        %v243 = vld [vmem:[#allocation2 + $0xc] sm:$0xf]
        %v244 = vld [vmem:[#allocation2 + $0x10] sm:$0xf]
        %v245 = vld [vmem:[#allocation2 + $0x14] sm:$0xf]
        %v246 = vld [vmem:[#allocation2 + $0x18] sm:$0xf]
        %v247 = vld [vmem:[#allocation2 + $0x1c] sm:$0xf]
        %v256 = vunpack.c.l.b16 %v240
        %v257 = vunpack.c.l.b16 %v241
        %v258 = vunpack.c.l.b16 %v242
        %v259 = vunpack.c.l.b16 %v243
        %v260 = vunpack.c.l.b16 %v244
        %v261 = vunpack.c.l.b16 %v245
        %v262 = vunpack.c.l.b16 %v246
        %v263 = vunpack.c.l.b16 %v247
        %v264 = vpack.c.b16 %v257, %v256
        %v265 = vpack.c.b16 %v259, %v258
        %v266 = vpack.c.b16 %v261, %v260
        %v267 = vpack.c.b16 %v263, %v262
        %vm272 = vcmask 523264
        %v274 = vsel %vm272, %v239, 0
        %276 = vmatprep.subr.bf16.mxu0 0
        %277 = vmatpush1.bf16.msra.mxu0 %v264
        %278 = vmatprep.subr.bf16.mxu0 0
        %279 = vmatpush1.bf16.msra.mxu0 %v265
        %280 = vmatprep.subr.bf16.mxu0 0
        %281 = vmatpush1.bf16.msra.mxu0 %v266
        %282 = vmatprep.subr.bf16.mxu0 0
        %283 = vmatpush1.bf16.msra.mxu0 %v267
        %284 = vmatprep.subr.bf16.mxu0 0
        %285 = vmatpush1.bf16.msra.mxu0 0
        %286 = vmatprep.subr.bf16.mxu0 0
        %287 = vmatpush1.bf16.msra.mxu0 0
        %288 = vmatprep.subr.bf16.mxu0 0
        %289 = vmatpush1.bf16.msra.mxu0 0
        %290 = vmatprep.subr.bf16.mxu0 0
        %291 = vmatpush1.bf16.msra.mxu0 0
        %292 = vmatprep.subr.bf16.mxu0 0
        %293 = vmatpush1.bf16.msra.mxu0 0
        %294 = vmatprep.subr.bf16.mxu0 0
        %295 = vmatpush1.bf16.msra.mxu0 0
        %296 = vmatprep.subr.bf16.mxu0 0
        %297 = vmatpush1.bf16.msra.mxu0 0
        %298 = vmatprep.subr.bf16.mxu0 0
        %299 = vmatpush1.bf16.msra.mxu0 0
        %300 = vmatprep.subr.bf16.mxu0 0
        %301 = vmatpush1.bf16.msra.mxu0 0
        %302 = vmatprep.subr.bf16.mxu0 0
        %303 = vmatpush1.bf16.msra.mxu0 0
        %304 = vmatprep.subr.bf16.mxu0 0
        %305 = vmatpush1.bf16.msra.mxu0 0
        %306 = vmatprep.subr.bf16.mxu0 0
        %307 = vmatpush1.bf16.msra.mxu0 0
        %308 = vmatprep.mubr.bf16.mxu0 0
        %309 = vmatmul.mubr.bf16.gmra.mrb[0].mxu0 %v274
        %v310 = vpop.f32.mrb[0].mxu0
        %v311 = vadd.f32 0.0, %v310
        %v312 = vpop.f32.mrb[0].mxu0
        %v313 = vpop.f32.mrb[0].mxu0
        %v314 = vpop.f32.mrb[0].mxu0
        %315 = vdwg.mxu0
        %316 = vst [vmem:[%s149] sm:$0xff] %v311
        %s317 = sand.u32 %s72, 1
        %s318 = scalar_lea.sflag [#allocation4], %s317
        %s319 = sand.u32 %s72, 1
        %s320 = smul.addr %s319, 8
        %s321 = scalar_lea.vmem [#allocation5], %s320
        // Predicated region
        $region33: #{tpu_custom_call.1} parent=27 // pred_check
          %p322 = pneg %p82
        $region34: #{tpu_custom_call.1} parent=27 // pred_check_branch
          %324 = sbr.rel (%p322) target = $region36
        $region35: #{tpu_custom_call.1} parent=27 // pred_region
          %s326 = ssub.s32 128, 128
          %327 = vsyncadd %s318, %s326
          %s328 = smul.addr %s17, 128
          %s329 = scalar_lea.hbm %s2, %s328
          %s331 = sshll.u32 %s321, 4
          %s332 = int_to_ptr.vmem [resolvable:$true] %s331
          %334 = dma.vmem_to_hbm [thread:$0]  %s332, 128, %s329, %s318
        $region36: #{tpu_custom_call.1} parent=27 // pred_fallthru
          _
      $region28: #{tpu_custom_call.1} parent=5 // pred_fallthru
        _
      %p335 = scmp.le.s32.totalorder 2, %s12
      // Predicated region
      $region37: #{tpu_custom_call.1} parent=5 // pred_check
        %p336 = pneg %p335
      $region38: #{tpu_custom_call.1} parent=5 // pred_check_branch
        %338 = sbr.rel (%p336) target = $region40
      $region39: #{tpu_custom_call.1} parent=5 // pred_region
        %s339 = ssub.s32 %s12, 2
        // Predicated region
        $region41: #{tpu_custom_call.1} parent=39 // pred_check
          %p340 = pneg %p88
        $region42: #{tpu_custom_call.1} parent=39 // pred_check_branch
          %342 = sbr.rel (%p340) target = $region44
        $region43: #{tpu_custom_call.1} parent=39 // pred_region
          %s343 = sand.u32 %s73, 1
          %s344 = scalar_lea.sflag [#allocation4], %s343
          %s345 = sand.u32 %s73, 1
          %s346 = smul.addr %s345, 8
          %s347 = scalar_lea.vmem [#allocation5], %s346
          %348 = dma.done %s344, 128
        $region44: #{tpu_custom_call.1} parent=39 // pred_fallthru
          _
      $region40: #{tpu_custom_call.1} parent=5 // pred_fallthru
        _
    $region6: #{tpu_custom_call.1} parent=1 // loop_footer
      %s16 = sadd.s32 1, %s12
    $region7: #{tpu_custom_call.1} parent=1 // loop_footer_branch
      %11 = sbr.rel target = $region3
    $region8: #{tpu_custom_call.1} parent=1 // loop_exit
      _
    %349 = vsyncpa [#allocation3], 1
    %s350 = scalar_lea.sflag [#allocation3], 1
    %351 = vsyncpa %s350, 1
    %352 = vsyncpa [#allocation4], 1
    %s353 = scalar_lea.sflag [#allocation4], 1
    %354 = vsyncpa %s353, 1

</llo_original>
